<compile_context>
chip_gen: v5e
topology: v5e:2x2
jax: 0.10.0
libtpu: 0.0.40
codegen_flags: <defaults>
</compile_context>

<pallas_src>
import functools
import math

import jax
import jax.numpy as jnp
from jax import lax
from jax.experimental import pallas as pl
from jax.experimental.pallas import tpu as pltpu

_MASK = -1e30  # large finite negative: avoids -inf arithmetic / NaN risk


# ---------------------------------------------------------------------------
# Kernel 1: fused QKV projection, (B, T, C) -> 3 x (B, H, T, D) bf16
# ---------------------------------------------------------------------------
def _qkv_proj_kernel(x_ref, w_ref, b_ref, q_ref, k_ref, v_ref):
    x = x_ref[0]                                                   # (TT, C) bf16
    # Single MXU-friendly GEMM (N = 3C lanes); 1/sqrt(D) is folded into the Q
    # third of w/b on the host.
    qkv = jnp.dot(x, w_ref[...], preferred_element_type=jnp.float32) + b_ref[...]
    H, D = q_ref.shape[1], q_ref.shape[3]
    C = H * D
    for h in range(H):                                             # once per row tile
        q_ref[0, h] = qkv[:, 0 * C + h * D:0 * C + (h + 1) * D].astype(q_ref.dtype)
        k_ref[0, h] = qkv[:, 1 * C + h * D:1 * C + (h + 1) * D].astype(k_ref.dtype)
        v_ref[0, h] = qkv[:, 2 * C + h * D:2 * C + (h + 1) * D].astype(v_ref.dtype)


# ---------------------------------------------------------------------------
# Kernel 2: causal flash attention over (B, H, T, D)
# ---------------------------------------------------------------------------
def _flash_kernel(q_ref, k_ref, v_ref, o_ref, m_scr, l_scr, acc_scr, *, exp_dtype):
    qi = pl.program_id(1)
    ki = pl.program_id(2)

    @pl.when(ki == 0)
    def _init():
        m_scr[...] = jnp.full(m_scr.shape, _MASK, jnp.float32)
        l_scr[...] = jnp.zeros(l_scr.shape, jnp.float32)
        acc_scr[...] = jnp.zeros(acc_scr.shape, jnp.float32)

    def _scores():
        # (H,TQ,D) x (H,TK,D) -> (H,TQ,TK), bf16 operands, f32 accumulation.
        return jnp.einsum('hqd,hkd->hqk', q_ref[0], k_ref[0],
                          preferred_element_type=jnp.float32)

    def _update(s):
        m_prev = m_scr[...]                                        # (H, TQ, 1)
        m_new = jnp.maximum(m_prev, jnp.max(s, axis=-1, keepdims=True))
        # bf16 exponent on v6e/v7x (bf16 EUP), f32 on v5e and older.
        alpha = jnp.exp((m_prev - m_new).astype(exp_dtype)).astype(jnp.float32)
        p = jnp.exp((s - m_new).astype(exp_dtype))
        l_scr[...] = alpha * l_scr[...] + jnp.sum(
            p.astype(jnp.float32), axis=-1, keepdims=True)
        acc_scr[...] = alpha * acc_scr[...] + jnp.einsum(
            'hqk,hkd->hqd', p.astype(jnp.bfloat16), v_ref[0],
            preferred_element_type=jnp.float32)
        m_scr[...] = m_new

    # Interior tiles (fully below the diagonal): no mask work at all.
    @pl.when(ki < qi)
    def _interior():
        _update(_scores())

    # Diagonal tile: the only one needing the causal mask, and the last tile
    # with any valid columns for this query block -> finalize here too.
    @pl.when(ki == qi)
    def _diag_and_finalize():
        s = _scores()
        TQ, TK = s.shape[1], s.shape[2]
        row = lax.broadcasted_iota(jnp.int32, (TQ, TK), 0)
        col = lax.broadcasted_iota(jnp.int32, (TQ, TK), 1)
        _update(jnp.where((col <= row)[None, :, :], s, _MASK))
        y = acc_scr[...] * pl.reciprocal(l_scr[...], approx=True)
        o_ref[0] = y.astype(o_ref.dtype)
    # Tiles with ki > qi do nothing; their K/V fetch is elided because the
    # index_map clamps the block index back to the diagonal.


# ---------------------------------------------------------------------------
# Kernel 3: head merge + output projection, (B, H, T, D) -> (B, T, C)
# ---------------------------------------------------------------------------
def _out_proj_kernel(y_ref, w_ref, b_ref, o_ref):
    H = y_ref.shape[1]
    y = jnp.concatenate([y_ref[0, h] for h in range(H)], axis=-1)  # (TT, C) bf16
    out = jnp.dot(y, w_ref[...], preferred_element_type=jnp.float32) + b_ref[...]
    o_ref[0] = out.astype(o_ref.dtype)


# ---------------------------------------------------------------------------
# Host wrapper
# ---------------------------------------------------------------------------
def _device_kind():
    try:
        return jax.devices()[0].device_kind.lower()
    except Exception:
        return ""


def _pick_tile(T, pref):
    for t in (pref, 256, 128, 64, 32, 16, 8):
        if t <= pref and t <= T and T % t == 0:
            return t
    return T


def causal_self_attention(x, w_attn, b_attn, w_proj, b_proj, *, n_head):
    """x: (B,T,C); w_attn: (C,3C); b_attn: (1,3C)/(3C,); w_proj: (C,C); b_proj: (1,C)/(C,)."""
    B, T, C = x.shape
    assert C % n_head == 0
    D = C // n_head
    scale = 1.0 / math.sqrt(D)

    kind = _device_kind()
    legacy = any(f"v{n}" in kind for n in (2, 3, 4, 5))  # pre-v6: 128 MXU, no bf16 EUP
    pref_tile = 128 if legacy else 256                    # v6e/v7x: 256-wide MXU
    exp_dtype = jnp.float32 if legacy else jnp.bfloat16
    vmem_limit = (48 if "v7" in kind else 96) * 1024 * 1024  # v7x: 64 MiB/TC physical

    # ---- host-side parameter prep ------------------------------------------
    w_attn = jnp.asarray(w_attn, jnp.float32)
    b_attn = jnp.asarray(b_attn, jnp.float32).reshape(1, 3 * C)
    w_proj = jnp.asarray(w_proj, jnp.float32)
    b_proj = jnp.asarray(b_proj, jnp.float32).reshape(1, C)

    # Fold 1/sqrt(D) into the Q third of the fused QKV projection.
    q_scale = jnp.concatenate(
        [jnp.full((1, C), scale, jnp.float32), jnp.ones((1, 2 * C), jnp.float32)],
        axis=-1)
    w_qkv = (w_attn * q_scale).astype(jnp.bfloat16)       # (C, 3C) bf16
    b_qkv = b_attn * q_scale                               # (1, 3C) f32
    w_o = w_proj.astype(jnp.bfloat16)                      # (C, C) bf16

    x_bf = x.astype(jnp.bfloat16)

    TT = _pick_tile(T, pref_tile)       # row tile for projection kernels
    TQ = TK = _pick_tile(T, pref_tile)  # flash tiles (must be equal)
    assert T % TT == 0 and T % TQ == 0 and TQ == TK
    NT, NQ, NK = T // TT, T // TQ, T // TK

    wspec = pl.BlockSpec(memory_space=pltpu.MemorySpace.VMEM)  # grid-invariant params
    proj_params = pltpu.CompilerParams(
        dimension_semantics=("parallel", "parallel"),
        vmem_limit_bytes=vmem_limit)

    # ---- 1) fused QKV projection -> (B, H, T, D) bf16 -----------------------
    q, k, v = pl.pallas_call(
        _qkv_proj_kernel,
        out_shape=[jax.ShapeDtypeStruct((B, n_head, T, D), jnp.bfloat16)] * 3,
        grid=(B, NT),
        in_specs=[
            pl.BlockSpec((1, TT, C), lambda b, t: (b, t, 0)),
            wspec, wspec,
        ],
        out_specs=[pl.BlockSpec((1, n_head, TT, D), lambda b, t: (b, 0, t, 0))] * 3,
        compiler_params=proj_params,
    )(x_bf, w_qkv, b_qkv)

    # ---- 2) flash attention -> (B, H, T, D) bf16 -----------------------------
    q_spec = pl.BlockSpec((1, n_head, TQ, D), lambda b, qi, ki: (b, 0, qi, 0))
    # Clamp above-diagonal requests back to the diagonal block: skipped causal
    # tiles re-request the same block, so Pallas elides their HBM fetch.
    kv_spec = pl.BlockSpec((1, n_head, TK, D),
                           lambda b, qi, ki: (b, 0, jnp.minimum(ki, qi), 0))

    y = pl.pallas_call(
        functools.partial(_flash_kernel, exp_dtype=exp_dtype),
        out_shape=jax.ShapeDtypeStruct((B, n_head, T, D), jnp.bfloat16),
        grid=(B, NQ, NK),
        in_specs=[q_spec, kv_spec, kv_spec],
        out_specs=pl.BlockSpec((1, n_head, TQ, D), lambda b, qi, ki: (b, 0, qi, 0)),
        scratch_shapes=[
            pltpu.VMEM((n_head, TQ, 1), jnp.float32),   # running max
            pltpu.VMEM((n_head, TQ, 1), jnp.float32),   # running sum
            pltpu.VMEM((n_head, TQ, D), jnp.float32),   # output accumulator
        ],
        compiler_params=pltpu.CompilerParams(
            dimension_semantics=("parallel", "parallel", "arbitrary"),
            vmem_limit_bytes=vmem_limit),
    )(q, k, v)

    # ---- 3) head merge + output projection -> (B, T, C) ---------------------
    out = pl.pallas_call(
        _out_proj_kernel,
        out_shape=jax.ShapeDtypeStruct((B, T, C), x.dtype),
        grid=(B, NT),
        in_specs=[
            pl.BlockSpec((1, n_head, TT, D), lambda b, t: (b, 0, t, 0)),
            wspec, wspec,
        ],
        out_specs=pl.BlockSpec((1, TT, C), lambda b, t: (b, t, 0)),
        compiler_params=proj_params,
    )(y, w_o, b_proj)

    return out


def _reference(x, w_attn, b_attn, w_proj, b_proj, n_head):
    """Pure-JAX f32 reference mirroring the PyTorch forward."""
    B, T, C = x.shape
    D = C // n_head
    qkv = x @ w_attn + b_attn                       # (B, T, 3C)
    q, k, v = jnp.split(qkv, 3, axis=-1)
    q = q.reshape(B, T, n_head, D).transpose(0, 2, 1, 3)
    k = k.reshape(B, T, n_head, D).transpose(0, 2, 1, 3)
    v = v.reshape(B, T, n_head, D).transpose(0, 2, 1, 3)
    s = jnp.einsum('bhtd,bhsd->bhts', q, k) / math.sqrt(D)
    mask = jnp.tril(jnp.ones((T, T), dtype=bool))
    s = jnp.where(mask, s, -jnp.inf)
    p = jax.nn.softmax(s, axis=-1)
    y = jnp.einsum('bhts,bhsd->bhtd', p, v)
    y = y.transpose(0, 2, 1, 3).reshape(B, T, C)
    return y @ w_proj + b_proj


if __name__ == "__main__":
    # Small config consistent with the module: n_embd=32, n_head=4, B=2, T=8.
    B, T, C, n_head = 2, 8, 32, 4

    key = jax.random.PRNGKey(0)
    kx, k1, k2, k3, k4 = jax.random.split(key, 5)

    x = jax.random.normal(kx, (B, T, C), dtype=jnp.float32)

    # Deterministic synthetic params (torch.nn.Linear-style uniform init bounds).
    bound = 1.0 / math.sqrt(C)
    w_attn = jax.random.uniform(k1, (C, 3 * C), jnp.float32, -bound, bound)
    b_attn = jax.random.uniform(k2, (1, 3 * C), jnp.float32, -bound, bound)
    w_proj = jax.random.uniform(k3, (C, C), jnp.float32, -bound, bound)
    b_proj = jax.random.uniform(k4, (1, C), jnp.float32, -bound, bound)

    out = causal_self_attention(x, w_attn, b_attn, w_proj, b_proj,
                                n_head=n_head)
    out = jax.block_until_ready(out)

    ref = _reference(x, w_attn, b_attn, w_proj, b_proj, n_head)
    assert out.shape == (B, T, C)
    # bf16 matmul operands / bf16 exp path / approx reciprocal => loose tolerance.
    assert jnp.allclose(out, ref, rtol=2e-2, atol=2e-2), (
        float(jnp.max(jnp.abs(out - ref))))

    print("KERNEL_OK")
</pallas_src>

<mosaic_0001>
module attributes {stable_mosaic.version = 11 : i64} {
  func.func @_qkv_proj_kernel(%arg0: i32, %arg1: i32, %arg2: memref<1x8x32xbf16, #tpu.memory_space<vmem>>, %arg3: memref<32x96xbf16, #tpu.memory_space<vmem>>, %arg4: memref<1x96xf32, #tpu.memory_space<vmem>>, %arg5: memref<1x4x8x8xbf16, #tpu.memory_space<vmem>>, %arg6: memref<1x4x8x8xbf16, #tpu.memory_space<vmem>>, %arg7: memref<1x4x8x8xbf16, #tpu.memory_space<vmem>>) attributes {dimension_semantics = [#tpu.dimension_semantics<parallel>, #tpu.dimension_semantics<parallel>], iteration_bounds = array<i64: 2, 1>, scalar_prefetch = 0 : i64, scratch_operands = 0 : i64, tpu.core_type = #tpu.core_type<tc>, window_params = [{transform_indices = @transform_0, window_bounds = array<i64: 1, 8, 32>}, {pipeline_mode = #tpu.pipeline_mode<synchronous>, transform_indices = @transform_1, window_bounds = array<i64: 32, 96>}, {pipeline_mode = #tpu.pipeline_mode<synchronous>, transform_indices = @transform_2, window_bounds = array<i64: 1, 96>}, {transform_indices = @transform_3, window_bounds = array<i64: 1, 4, 8, 8>}, {transform_indices = @transform_4, window_bounds = array<i64: 1, 4, 8, 8>}, {transform_indices = @transform_5, window_bounds = array<i64: 1, 4, 8, 8>}]} {
    %c0 = arith.constant 0 : index
    %c0_0 = arith.constant 0 : index
    %c0_1 = arith.constant 0 : index
    %0 = vector.load %arg2[%c0, %c0_0, %c0_1] : memref<1x8x32xbf16, #tpu.memory_space<vmem>>, vector<1x8x32xbf16>
    %1 = vector.shape_cast %0 : vector<1x8x32xbf16> to vector<8x32xbf16>
    %c0_2 = arith.constant 0 : index
    %c0_3 = arith.constant 0 : index
    %2 = vector.load %arg3[%c0_2, %c0_3] : memref<32x96xbf16, #tpu.memory_space<vmem>>, vector<32x96xbf16>
    %cst = arith.constant dense<0.000000e+00> : vector<8x96xf32>
    %3 = tpu.matmul %1, %2, %cst {dimension_numbers = #tpu.dot_dimension_numbers<[1], [0], [0], [1], [0, 0, 1, 1], [], []>} : vector<8x32xbf16>, vector<32x96xbf16>, vector<8x96xf32> -> vector<8x96xf32>
    %c0_4 = arith.constant 0 : index
    %c0_5 = arith.constant 0 : index
    %4 = vector.load %arg4[%c0_4, %c0_5] : memref<1x96xf32, #tpu.memory_space<vmem>>, vector<1x96xf32>
    %5 = vector.broadcast %4 : vector<1x96xf32> to vector<8x96xf32>
    %6 = arith.addf %3, %5 : vector<8x96xf32>
    %7 = vector.extract_strided_slice %6 {offsets = [0, 0], sizes = [8, 8], strides = [1, 1]} : vector<8x96xf32> to vector<8x8xf32>
    %8 = arith.truncf %7 : vector<8x8xf32> to vector<8x8xbf16>
    %c0_6 = arith.constant 0 : index
    %c0_7 = arith.constant 0 : index
    %c0_8 = arith.constant 0 : index
    %c0_9 = arith.constant 0 : index
    %9 = vector.load %arg5[%c0_6, %c0_7, %c0_8, %c0_9] : memref<1x4x8x8xbf16, #tpu.memory_space<vmem>>, vector<1x1x8x8xbf16>
    %10 = vector.shape_cast %9 : vector<1x1x8x8xbf16> to vector<8x8xbf16>
    %11 = vector.shape_cast %8 : vector<8x8xbf16> to vector<1x1x8x8xbf16>
    tpu.vector_store %arg5[%c0_6, %c0_7, %c0_8, %c0_9], %11 {strides = array<i32>} : memref<1x4x8x8xbf16, #tpu.memory_space<vmem>>, vector<1x1x8x8xbf16>,
    %12 = vector.extract_strided_slice %6 {offsets = [0, 32], sizes = [8, 8], strides = [1, 1]} : vector<8x96xf32> to vector<8x8xf32>
    %13 = arith.truncf %12 : vector<8x8xf32> to vector<8x8xbf16>
    %c0_10 = arith.constant 0 : index
    %c0_11 = arith.constant 0 : index
    %c0_12 = arith.constant 0 : index
    %c0_13 = arith.constant 0 : index
    %14 = vector.load %arg6[%c0_10, %c0_11, %c0_12, %c0_13] : memref<1x4x8x8xbf16, #tpu.memory_space<vmem>>, vector<1x1x8x8xbf16>
    %15 = vector.shape_cast %14 : vector<1x1x8x8xbf16> to vector<8x8xbf16>
    %16 = vector.shape_cast %13 : vector<8x8xbf16> to vector<1x1x8x8xbf16>
    tpu.vector_store %arg6[%c0_10, %c0_11, %c0_12, %c0_13], %16 {strides = array<i32>} : memref<1x4x8x8xbf16, #tpu.memory_space<vmem>>, vector<1x1x8x8xbf16>,
    %17 = vector.extract_strided_slice %6 {offsets = [0, 64], sizes = [8, 8], strides = [1, 1]} : vector<8x96xf32> to vector<8x8xf32>
    %18 = arith.truncf %17 : vector<8x8xf32> to vector<8x8xbf16>
    %c0_14 = arith.constant 0 : index
    %c0_15 = arith.constant 0 : index
    %c0_16 = arith.constant 0 : index
    %c0_17 = arith.constant 0 : index
    %19 = vector.load %arg7[%c0_14, %c0_15, %c0_16, %c0_17] : memref<1x4x8x8xbf16, #tpu.memory_space<vmem>>, vector<1x1x8x8xbf16>
    %20 = vector.shape_cast %19 : vector<1x1x8x8xbf16> to vector<8x8xbf16>
    %21 = vector.shape_cast %18 : vector<8x8xbf16> to vector<1x1x8x8xbf16>
    tpu.vector_store %arg7[%c0_14, %c0_15, %c0_16, %c0_17], %21 {strides = array<i32>} : memref<1x4x8x8xbf16, #tpu.memory_space<vmem>>, vector<1x1x8x8xbf16>,
    %22 = vector.extract_strided_slice %6 {offsets = [0, 8], sizes = [8, 8], strides = [1, 1]} : vector<8x96xf32> to vector<8x8xf32>
    %23 = arith.truncf %22 : vector<8x8xf32> to vector<8x8xbf16>
    %c0_18 = arith.constant 0 : index
    %c1 = arith.constant 1 : index
    %c0_19 = arith.constant 0 : index
    %c0_20 = arith.constant 0 : index
    %24 = vector.load %arg5[%c0_18, %c1, %c0_19, %c0_20] : memref<1x4x8x8xbf16, #tpu.memory_space<vmem>>, vector<1x1x8x8xbf16>
    %25 = vector.shape_cast %24 : vector<1x1x8x8xbf16> to vector<8x8xbf16>
    %26 = vector.shape_cast %23 : vector<8x8xbf16> to vector<1x1x8x8xbf16>
    tpu.vector_store %arg5[%c0_18, %c1, %c0_19, %c0_20], %26 {strides = array<i32>} : memref<1x4x8x8xbf16, #tpu.memory_space<vmem>>, vector<1x1x8x8xbf16>,
    %27 = vector.extract_strided_slice %6 {offsets = [0, 40], sizes = [8, 8], strides = [1, 1]} : vector<8x96xf32> to vector<8x8xf32>
    %28 = arith.truncf %27 : vector<8x8xf32> to vector<8x8xbf16>
    %c0_21 = arith.constant 0 : index
    %c1_22 = arith.constant 1 : index
    %c0_23 = arith.constant 0 : index
    %c0_24 = arith.constant 0 : index
    %29 = vector.load %arg6[%c0_21, %c1_22, %c0_23, %c0_24] : memref<1x4x8x8xbf16, #tpu.memory_space<vmem>>, vector<1x1x8x8xbf16>
    %30 = vector.shape_cast %29 : vector<1x1x8x8xbf16> to vector<8x8xbf16>
    %31 = vector.shape_cast %28 : vector<8x8xbf16> to vector<1x1x8x8xbf16>
    tpu.vector_store %arg6[%c0_21, %c1_22, %c0_23, %c0_24], %31 {strides = array<i32>} : memref<1x4x8x8xbf16, #tpu.memory_space<vmem>>, vector<1x1x8x8xbf16>,
    %32 = vector.extract_strided_slice %6 {offsets = [0, 72], sizes = [8, 8], strides = [1, 1]} : vector<8x96xf32> to vector<8x8xf32>
    %33 = arith.truncf %32 : vector<8x8xf32> to vector<8x8xbf16>
    %c0_25 = arith.constant 0 : index
    %c1_26 = arith.constant 1 : index
    %c0_27 = arith.constant 0 : index
    %c0_28 = arith.constant 0 : index
    %34 = vector.load %arg7[%c0_25, %c1_26, %c0_27, %c0_28] : memref<1x4x8x8xbf16, #tpu.memory_space<vmem>>, vector<1x1x8x8xbf16>
    %35 = vector.shape_cast %34 : vector<1x1x8x8xbf16> to vector<8x8xbf16>
    %36 = vector.shape_cast %33 : vector<8x8xbf16> to vector<1x1x8x8xbf16>
    tpu.vector_store %arg7[%c0_25, %c1_26, %c0_27, %c0_28], %36 {strides = array<i32>} : memref<1x4x8x8xbf16, #tpu.memory_space<vmem>>, vector<1x1x8x8xbf16>,
    %37 = vector.extract_strided_slice %6 {offsets = [0, 16], sizes = [8, 8], strides = [1, 1]} : vector<8x96xf32> to vector<8x8xf32>
    %38 = arith.truncf %37 : vector<8x8xf32> to vector<8x8xbf16>
    %c0_29 = arith.constant 0 : index
    %c2 = arith.constant 2 : index
    %c0_30 = arith.constant 0 : index
    %c0_31 = arith.constant 0 : index
    %39 = vector.load %arg5[%c0_29, %c2, %c0_30, %c0_31] : memref<1x4x8x8xbf16, #tpu.memory_space<vmem>>, vector<1x1x8x8xbf16>
    %40 = vector.shape_cast %39 : vector<1x1x8x8xbf16> to vector<8x8xbf16>
    %41 = vector.shape_cast %38 : vector<8x8xbf16> to vector<1x1x8x8xbf16>
    tpu.vector_store %arg5[%c0_29, %c2, %c0_30, %c0_31], %41 {strides = array<i32>} : memref<1x4x8x8xbf16, #tpu.memory_space<vmem>>, vector<1x1x8x8xbf16>,
    %42 = vector.extract_strided_slice %6 {offsets = [0, 48], sizes = [8, 8], strides = [1, 1]} : vector<8x96xf32> to vector<8x8xf32>
    %43 = arith.truncf %42 : vector<8x8xf32> to vector<8x8xbf16>
    %c0_32 = arith.constant 0 : index
    %c2_33 = arith.constant 2 : index
    %c0_34 = arith.constant 0 : index
    %c0_35 = arith.constant 0 : index
    %44 = vector.load %arg6[%c0_32, %c2_33, %c0_34, %c0_35] : memref<1x4x8x8xbf16, #tpu.memory_space<vmem>>, vector<1x1x8x8xbf16>
    %45 = vector.shape_cast %44 : vector<1x1x8x8xbf16> to vector<8x8xbf16>
    %46 = vector.shape_cast %43 : vector<8x8xbf16> to vector<1x1x8x8xbf16>
    tpu.vector_store %arg6[%c0_32, %c2_33, %c0_34, %c0_35], %46 {strides = array<i32>} : memref<1x4x8x8xbf16, #tpu.memory_space<vmem>>, vector<1x1x8x8xbf16>,
    %47 = vector.extract_strided_slice %6 {offsets = [0, 80], sizes = [8, 8], strides = [1, 1]} : vector<8x96xf32> to vector<8x8xf32>
    %48 = arith.truncf %47 : vector<8x8xf32> to vector<8x8xbf16>
    %c0_36 = arith.constant 0 : index
    %c2_37 = arith.constant 2 : index
    %c0_38 = arith.constant 0 : index
    %c0_39 = arith.constant 0 : index
    %49 = vector.load %arg7[%c0_36, %c2_37, %c0_38, %c0_39] : memref<1x4x8x8xbf16, #tpu.memory_space<vmem>>, vector<1x1x8x8xbf16>
    %50 = vector.shape_cast %49 : vector<1x1x8x8xbf16> to vector<8x8xbf16>
    %51 = vector.shape_cast %48 : vector<8x8xbf16> to vector<1x1x8x8xbf16>
    tpu.vector_store %arg7[%c0_36, %c2_37, %c0_38, %c0_39], %51 {strides = array<i32>} : memref<1x4x8x8xbf16, #tpu.memory_space<vmem>>, vector<1x1x8x8xbf16>,
    %52 = vector.extract_strided_slice %6 {offsets = [0, 24], sizes = [8, 8], strides = [1, 1]} : vector<8x96xf32> to vector<8x8xf32>
    %53 = arith.truncf %52 : vector<8x8xf32> to vector<8x8xbf16>
    %c0_40 = arith.constant 0 : index
    %c3 = arith.constant 3 : index
    %c0_41 = arith.constant 0 : index
    %c0_42 = arith.constant 0 : index
    %54 = vector.load %arg5[%c0_40, %c3, %c0_41, %c0_42] : memref<1x4x8x8xbf16, #tpu.memory_space<vmem>>, vector<1x1x8x8xbf16>
    %55 = vector.shape_cast %54 : vector<1x1x8x8xbf16> to vector<8x8xbf16>
    %56 = vector.shape_cast %53 : vector<8x8xbf16> to vector<1x1x8x8xbf16>
    tpu.vector_store %arg5[%c0_40, %c3, %c0_41, %c0_42], %56 {strides = array<i32>} : memref<1x4x8x8xbf16, #tpu.memory_space<vmem>>, vector<1x1x8x8xbf16>,
    %57 = vector.extract_strided_slice %6 {offsets = [0, 56], sizes = [8, 8], strides = [1, 1]} : vector<8x96xf32> to vector<8x8xf32>
    %58 = arith.truncf %57 : vector<8x8xf32> to vector<8x8xbf16>
    %c0_43 = arith.constant 0 : index
    %c3_44 = arith.constant 3 : index
    %c0_45 = arith.constant 0 : index
    %c0_46 = arith.constant 0 : index
    %59 = vector.load %arg6[%c0_43, %c3_44, %c0_45, %c0_46] : memref<1x4x8x8xbf16, #tpu.memory_space<vmem>>, vector<1x1x8x8xbf16>
    %60 = vector.shape_cast %59 : vector<1x1x8x8xbf16> to vector<8x8xbf16>
    %61 = vector.shape_cast %58 : vector<8x8xbf16> to vector<1x1x8x8xbf16>
    tpu.vector_store %arg6[%c0_43, %c3_44, %c0_45, %c0_46], %61 {strides = array<i32>} : memref<1x4x8x8xbf16, #tpu.memory_space<vmem>>, vector<1x1x8x8xbf16>,
    %62 = vector.extract_strided_slice %6 {offsets = [0, 88], sizes = [8, 8], strides = [1, 1]} : vector<8x96xf32> to vector<8x8xf32>
    %63 = arith.truncf %62 : vector<8x8xf32> to vector<8x8xbf16>
    %c0_47 = arith.constant 0 : index
    %c3_48 = arith.constant 3 : index
    %c0_49 = arith.constant 0 : index
    %c0_50 = arith.constant 0 : index
    %64 = vector.load %arg7[%c0_47, %c3_48, %c0_49, %c0_50] : memref<1x4x8x8xbf16, #tpu.memory_space<vmem>>, vector<1x1x8x8xbf16>
    %65 = vector.shape_cast %64 : vector<1x1x8x8xbf16> to vector<8x8xbf16>
    %66 = vector.shape_cast %63 : vector<8x8xbf16> to vector<1x1x8x8xbf16>
    tpu.vector_store %arg7[%c0_47, %c3_48, %c0_49, %c0_50], %66 {strides = array<i32>} : memref<1x4x8x8xbf16, #tpu.memory_space<vmem>>, vector<1x1x8x8xbf16>,
    return
  }
  func.func @transform_0(%arg0: i32, %arg1: i32) -> (i32, i32, i32) {
    %c0_i32 = arith.constant 0 : i32
    %c0_i32_0 = arith.constant 0 : i32
    return %arg0, %arg1, %c0_i32 : i32, i32, i32
  }
  func.func @transform_1(%arg0: i32, %arg1: i32) -> (i32, i32) {
    %c0_i32 = arith.constant 0 : i32
    %c0_i32_0 = arith.constant 0 : i32
    %c0_i32_1 = arith.constant 0 : i32
    return %c0_i32, %c0_i32_0 : i32, i32
  }
  func.func @transform_2(%arg0: i32, %arg1: i32) -> (i32, i32) {
    %c0_i32 = arith.constant 0 : i32
    %c0_i32_0 = arith.constant 0 : i32
    %c0_i32_1 = arith.constant 0 : i32
    return %c0_i32, %c0_i32_0 : i32, i32
  }
  func.func @transform_3(%arg0: i32, %arg1: i32) -> (i32, i32, i32, i32) {
    %c0_i32 = arith.constant 0 : i32
    %c0_i32_0 = arith.constant 0 : i32
    %c0_i32_1 = arith.constant 0 : i32
    return %arg0, %c0_i32, %arg1, %c0_i32_0 : i32, i32, i32, i32
  }
  func.func @transform_4(%arg0: i32, %arg1: i32) -> (i32, i32, i32, i32) {
    %c0_i32 = arith.constant 0 : i32
    %c0_i32_0 = arith.constant 0 : i32
    %c0_i32_1 = arith.constant 0 : i32
    return %arg0, %c0_i32, %arg1, %c0_i32_0 : i32, i32, i32, i32
  }
  func.func @transform_5(%arg0: i32, %arg1: i32) -> (i32, i32, i32, i32) {
    %c0_i32 = arith.constant 0 : i32
    %c0_i32_0 = arith.constant 0 : i32
    %c0_i32_1 = arith.constant 0 : i32
    return %arg0, %c0_i32, %arg1, %c0_i32_0 : i32, i32, i32, i32
  }
}

</mosaic_0001>

<llo_original>
// kernel: tpu_custom_call.1
$region0: #{tpu_custom_call.1}
  #allocation0 [shape = 'u32[]', space=smem, size = 0x4, offset = 0x4, fixed_abs, tag = 'smem constant byte address 0x4 - core index']
  #allocation1 [shape = 'u32[72,128]{1,0:T(1,128)}', space=vmem, size = 0x9000, scoped, tag = 'internal scratch']
  %s0 = inlined_call_operand.hbm [shape: bf16[2,8,32], index: 0, kind: input, shape index: {}]
  %s1 = inlined_call_operand.hbm [shape: bf16[32,96], index: 1, kind: input, shape index: {}]
  %s2 = inlined_call_operand.vmem [shape: f32[1,96], index: 2, kind: input, shape index: {}]
  %s3 = inlined_call_operand.hbm [shape: bf16[2,4,8,8], index: 3, kind: output, shape index: {0}]
  %s4 = inlined_call_operand.hbm [shape: bf16[2,4,8,8], index: 4, kind: output, shape index: {1}]
  %s5 = inlined_call_operand.hbm [shape: bf16[2,4,8,8], index: 5, kind: output, shape index: {2}]
  %6 = xla_tuple %s3, %s4, %s5
  %s7 = sld [smem:[#allocation0]]
  $region69: #{tpu_custom_call.1} parent=0
    _
  %s9 = ssub.s32 1, %s7
  %s10 = scalar_select 0, %s9, %s7
  $region1: #{tpu_custom_call.1} parent=0
    #allocation2 [shape = 'u8[4096]{0}', space=vmem, size = 0x1000, scoped, tag = 'input window, operand 0']
    #allocation3 [shape = 's32[2]{0}', space=sflag, size = 0x8, scoped, tag = 'scoped memory for tpu_custom_call.1']
    #allocation4 [shape = 's32[2]{0}', space=sflag, size = 0x8, scoped, tag = 'scoped memory for tpu_custom_call.1']
    #allocation5 [shape = 'u8[8192]{0}', space=vmem, size = 0x2000, scoped, tag = 'input window, operand 1, single buffered']
    #allocation6 [shape = 's32[1]{0}', space=sflag, size = 0x4, scoped, tag = 'scoped memory for tpu_custom_call.1']
    #allocation7 [shape = 'u8[16384]{0}', space=vmem, size = 0x4000, scoped, tag = 'output window, operand 0']
    #allocation8 [shape = 'u8[16384]{0}', space=vmem, size = 0x4000, scoped, tag = 'output window, operand 1']
    #allocation9 [shape = 's32[2]{0}', space=sflag, size = 0x8, scoped, tag = 'scoped memory for tpu_custom_call.1']
    #allocation10 [shape = 'u8[16384]{0}', space=vmem, size = 0x4000, scoped, tag = 'output window, operand 2']
    %11 = vsyncpa [#allocation3], 0
    %s12 = scalar_lea.sflag [#allocation3], 1
    %13 = vsyncpa %s12, 0
    %14 = vsyncpa [#allocation6], 0
    %15 = vsyncpa [#allocation4], 0
    %s16 = scalar_lea.sflag [#allocation4], 1
    %17 = vsyncpa %s16, 0
    %18 = vsyncpa [#allocation9], 0
    %s19 = scalar_lea.sflag [#allocation9], 1
    %20 = vsyncpa %s19, 0
    loop: start=0, step=1, limit=4
    $region2: #{tpu_custom_call.1} parent=1 // loop_pre_header
      _
    $region3: #{tpu_custom_call.1} parent=1 // loop_header
      %s22 = sphi 0, %s26
      %p23 = scmp.ge.s32.totalorder %s22, 4
      %s29 = sphi 0, %s41
      %s30 = sphi 0, %s37
      %s31 = sphi 0, %s29
      %s32 = sphi 0, %s30
      %s33 = sphi 0, %s31
      %s34 = sphi 0, %s32
      %s46 = sphi 0, %s48
      %s49 = sphi 0, %s46
      %s50 = sphi 0, %s49
      %s66 = sphi 0, %s50
      %s70 = sphi 0, %s70
      %s72 = sphi 0, %s70
      %s73 = sphi 0, %s72
      %s87 = sphi 0, %s73
      %s91 = sphi 0, %s91
      %s93 = sphi 0, %s91
      %s94 = sphi 0, %s93
      %s108 = sphi 0, %s94
      %s116 = sphi 0, %s118
      %s119 = sphi 0, %s116
      %s120 = sphi 0, %s119
      %s136 = sphi 0, %s120
      %s144 = sphi 0, %s146
      %s147 = sphi 0, %s144
      %s148 = sphi 0, %s147
      %s164 = sphi 0, %s148
      %s172 = sphi 0, %s174
      %s175 = sphi 0, %s172
      %s176 = sphi 0, %s175
      %s192 = sphi 0, %s176
    $region4: #{tpu_custom_call.1} parent=1 // loop_header_branch
      %25 = sbr.rel (%p23) target = $region8
    $region5: #{tpu_custom_call.1} parent=1 // loop_body
      %s27 = ssub.s32 %s22, 1
      %s28 = ssub.s32 %s22, 2
      %s35 = sadd.s32 1, %s30
      %p36 = scmp.ge.s32.totalorder %s35, 1
      %s37 = scalar_select %p36, 0, %s35
      %s38 = sadd.s32 1, %s29
      %s39 = scalar_select %p36, %s38, %s29
      %p40 = scmp.ge.s32.totalorder %s39, 2
      %s41 = scalar_select %p40, 0, %s39
      %s42 = ssub.s32 %s29, %s41
      %s43 = ssub.s32 %s30, %s37
      %s44 = sor.u32 %s42, %s43
      %p45 = scmp.eq.s32.totalorder %s44, 0
      %s47 = sadd.s32 %s46, 1
      %s48 = scalar_select %p45, %s46, %s47
      %p51 = pneg %p45
      %p52 = scmp.eq.s32.totalorder %s22, 1
      %p53 = por %p51, %p52
      %p54 = scmp.ne.s32.totalorder %s46, %s49
      %p55 = scmp.eq.s32.totalorder %s22, 0
      %p56 = por %p54, %p55
      %p57 = scmp.ne.s32.totalorder %s46, %s49
      %p58 = scmp.eq.s32.totalorder %s27, 1
      %p59 = por %p57, %p58
      %p60 = scmp.ne.s32.totalorder %s49, %s50
      %p61 = scmp.eq.s32.totalorder %s27, 0
      %p62 = por %p60, %p61
      %p63 = scmp.ne.s32.totalorder %s49, %s50
      %p64 = scmp.eq.s32.totalorder %s28, 1
      %p65 = por %p63, %p64
      %p67 = scmp.ne.s32.totalorder %s50, %s66
      %p68 = scmp.eq.s32.totalorder %s28, 0
      %p69 = por %p67, %p68
      %s71 = sadd.s32 %s70, 1
      %p74 = scmp.eq.s32.totalorder %s22, 1
      %p75 = scmp.ne.s32.totalorder %s70, %s72
      %p76 = scmp.eq.s32.totalorder %s22, 0
      %p77 = por %p75, %p76
      %p78 = scmp.ne.s32.totalorder %s70, %s72
      %p79 = scmp.eq.s32.totalorder %s27, 1
      %p80 = por %p78, %p79
      %p81 = scmp.ne.s32.totalorder %s72, %s73
      %p82 = scmp.eq.s32.totalorder %s27, 0
      %p83 = por %p81, %p82
      %p84 = scmp.ne.s32.totalorder %s72, %s73
      %p85 = scmp.eq.s32.totalorder %s28, 1
      %p86 = por %p84, %p85
      %p88 = scmp.ne.s32.totalorder %s73, %s87
      %p89 = scmp.eq.s32.totalorder %s28, 0
      %p90 = por %p88, %p89
      %s92 = sadd.s32 %s91, 1
      %p95 = scmp.eq.s32.totalorder %s22, 1
      %p96 = scmp.ne.s32.totalorder %s91, %s93
      %p97 = scmp.eq.s32.totalorder %s22, 0
      %p98 = por %p96, %p97
      %p99 = scmp.ne.s32.totalorder %s91, %s93
      %p100 = scmp.eq.s32.totalorder %s27, 1
      %p101 = por %p99, %p100
      %p102 = scmp.ne.s32.totalorder %s93, %s94
      %p103 = scmp.eq.s32.totalorder %s27, 0
      %p104 = por %p102, %p103
      %p105 = scmp.ne.s32.totalorder %s93, %s94
      %p106 = scmp.eq.s32.totalorder %s28, 1
      %p107 = por %p105, %p106
      %p109 = scmp.ne.s32.totalorder %s94, %s108
      %p110 = scmp.eq.s32.totalorder %s28, 0
      %p111 = por %p109, %p110
      %s112 = ssub.s32 %s29, %s41
      %s113 = ssub.s32 %s30, %s37
      %s114 = sor.u32 %s112, %s113
      %p115 = scmp.eq.s32.totalorder %s114, 0
      %s117 = sadd.s32 %s116, 1
      %s118 = scalar_select %p115, %s116, %s117
      %p121 = pneg %p115
      %p122 = scmp.eq.s32.totalorder %s22, 1
      %p123 = por %p121, %p122
      %p124 = scmp.ne.s32.totalorder %s116, %s119
      %p125 = scmp.eq.s32.totalorder %s22, 0
      %p126 = por %p124, %p125
      %p127 = scmp.ne.s32.totalorder %s116, %s119
      %p128 = scmp.eq.s32.totalorder %s27, 1
      %p129 = por %p127, %p128
      %p130 = scmp.ne.s32.totalorder %s119, %s120
      %p131 = scmp.eq.s32.totalorder %s27, 0
      %p132 = por %p130, %p131
      %p133 = scmp.ne.s32.totalorder %s119, %s120
      %p134 = scmp.eq.s32.totalorder %s28, 1
      %p135 = por %p133, %p134
      %p137 = scmp.ne.s32.totalorder %s120, %s136
      %p138 = scmp.eq.s32.totalorder %s28, 0
      %p139 = por %p137, %p138
      %s140 = ssub.s32 %s29, %s41
      %s141 = ssub.s32 %s30, %s37
      %s142 = sor.u32 %s140, %s141
      %p143 = scmp.eq.s32.totalorder %s142, 0
      %s145 = sadd.s32 %s144, 1
      %s146 = scalar_select %p143, %s144, %s145
      %p149 = pneg %p143
      %p150 = scmp.eq.s32.totalorder %s22, 1
      %p151 = por %p149, %p150
      %p152 = scmp.ne.s32.totalorder %s144, %s147
      %p153 = scmp.eq.s32.totalorder %s22, 0
      %p154 = por %p152, %p153
      %p155 = scmp.ne.s32.totalorder %s144, %s147
      %p156 = scmp.eq.s32.totalorder %s27, 1
      %p157 = por %p155, %p156
      %p158 = scmp.ne.s32.totalorder %s147, %s148
      %p159 = scmp.eq.s32.totalorder %s27, 0
      %p160 = por %p158, %p159
      %p161 = scmp.ne.s32.totalorder %s147, %s148
      %p162 = scmp.eq.s32.totalorder %s28, 1
      %p163 = por %p161, %p162
      %p165 = scmp.ne.s32.totalorder %s148, %s164
      %p166 = scmp.eq.s32.totalorder %s28, 0
      %p167 = por %p165, %p166
      %s168 = ssub.s32 %s29, %s41
      %s169 = ssub.s32 %s30, %s37
      %s170 = sor.u32 %s168, %s169
      %p171 = scmp.eq.s32.totalorder %s170, 0
      %s173 = sadd.s32 %s172, 1
      %s174 = scalar_select %p171, %s172, %s173
      %p177 = pneg %p171
      %p178 = scmp.eq.s32.totalorder %s22, 1
      %p179 = por %p177, %p178
      %p180 = scmp.ne.s32.totalorder %s172, %s175
      %p181 = scmp.eq.s32.totalorder %s22, 0
      %p182 = por %p180, %p181
      %p183 = scmp.ne.s32.totalorder %s172, %s175
      %p184 = scmp.eq.s32.totalorder %s27, 1
      %p185 = por %p183, %p184
      %p186 = scmp.ne.s32.totalorder %s175, %s176
      %p187 = scmp.eq.s32.totalorder %s27, 0
      %p188 = por %p186, %p187
      %p189 = scmp.ne.s32.totalorder %s175, %s176
      %p190 = scmp.eq.s32.totalorder %s28, 1
      %p191 = por %p189, %p190
      %p193 = scmp.ne.s32.totalorder %s176, %s192
      %p194 = scmp.eq.s32.totalorder %s28, 0
      %p195 = por %p193, %p194
      %p196 = scmp.le.s32.totalorder 1, %s22
      %p197 = scmp.lt.s32.totalorder %s22, 3
      %p198 = pnand %p196, %p197
      %p199 = pneg %p198
      // Predicated region
      $region9: #{tpu_custom_call.1} parent=5 // pred_check
        _
      $region10: #{tpu_custom_call.1} parent=5 // pred_check_branch
        %201 = sbr.rel (%p198) target = $region12
      $region11: #{tpu_custom_call.1} parent=5 // pred_region
        %s202 = ssub.s32 %s22, 1
        // Predicated region
        $region13: #{tpu_custom_call.1} parent=11 // pred_check
          %p203 = pneg %p83
        $region14: #{tpu_custom_call.1} parent=11 // pred_check_branch
          %205 = sbr.rel (%p203) target = $region16
        $region15: #{tpu_custom_call.1} parent=11 // pred_region
          %207 = vsyncadd [#allocation6], 0
          %s208 = sshll.u32 %s1, 4
          %s209 = int_to_ptr.hbm [resolvable:$true] %s208
          %s210 = sshll.u32 [#allocation5], 4
          %s211 = int_to_ptr.vmem [resolvable:$true] %s210
          %216 = dma.hbm_to_vmem [thread:$0]  %s209, 256, %s211, [#allocation6], 64, 64, 4
        $region16: #{tpu_custom_call.1} parent=11 // pred_fallthru
          _
        // Predicated region
        $region17: #{tpu_custom_call.1} parent=11 // pred_check
          %p217 = pneg %p104
        $region18: #{tpu_custom_call.1} parent=11 // pred_check_branch
          %219 = sbr.rel (%p217) target = $region20
        $region19: #{tpu_custom_call.1} parent=11 // pred_region
          _
        $region20: #{tpu_custom_call.1} parent=11 // pred_fallthru
          _
      $region12: #{tpu_custom_call.1} parent=5 // pred_fallthru
        _
      %p220 = scmp.lt.s32.totalorder %s22, 2
      // Predicated region
      $region21: #{tpu_custom_call.1} parent=5 // pred_check
        %p221 = pneg %p220
      $region22: #{tpu_custom_call.1} parent=5 // pred_check_branch
        %223 = sbr.rel (%p221) target = $region24
      $region23: #{tpu_custom_call.1} parent=5 // pred_region
        // Predicated region
        $region25: #{tpu_custom_call.1} parent=23 // pred_check
          %p224 = pneg %p56
        $region26: #{tpu_custom_call.1} parent=23 // pred_check_branch
          %226 = sbr.rel (%p224) target = $region28
        $region27: #{tpu_custom_call.1} parent=23 // pred_region
          %s227 = sand.u32 %s46, 1
          %s228 = scalar_lea.sflag [#allocation3], %s227
          %s229 = sand.u32 %s46, 1
          %s230 = smul.addr %s229, 4
          %s231 = scalar_lea.vmem [#allocation2], %s230
          %233 = vsyncadd %s228, 0
          %s234 = sadd.s32 %s30, %s29
          %s235 = smul.addr %s234, 4
          %s236 = scalar_lea.hbm %s0, %s235
          %s238 = sshll.u32 %s236, 4
          %s239 = int_to_ptr.hbm [resolvable:$true] %s238
          %s240 = sshll.u32 %s231, 4
          %s241 = int_to_ptr.vmem [resolvable:$true] %s240
          %243 = dma.hbm_to_vmem [thread:$0]  %s239, 64, %s241, %s228
        $region28: #{tpu_custom_call.1} parent=23 // pred_fallthru
          _
      $region24: #{tpu_custom_call.1} parent=5 // pred_fallthru
        _
      %p244 = scmp.le.s32.totalorder 1, %s22
      %p245 = scmp.lt.s32.totalorder %s22, 3
      %p246 = pnand %p244, %p245
      %p247 = pneg %p246
      // Predicated region
      $region29: #{tpu_custom_call.1} parent=5 // pred_check
        _
      $region30: #{tpu_custom_call.1} parent=5 // pred_check_branch
        %249 = sbr.rel (%p246) target = $region32
      $region31: #{tpu_custom_call.1} parent=5 // pred_region
        %s250 = ssub.s32 %s22, 1
        %s251 = sand.u32 %s49, 1
        %s252 = scalar_lea.sflag [#allocation3], %s251
        %s253 = sand.u32 %s49, 1
        %s254 = smul.addr %s253, 4
        %s255 = scalar_lea.vmem [#allocation2], %s254
        // Predicated region
        $region33: #{tpu_custom_call.1} parent=31 // pred_check
          %p256 = pneg %p62
        $region34: #{tpu_custom_call.1} parent=31 // pred_check_branch
          %258 = sbr.rel (%p256) target = $region36
        $region35: #{tpu_custom_call.1} parent=31 // pred_region
          %260 = dma.done %s252, 64
        $region36: #{tpu_custom_call.1} parent=31 // pred_fallthru
          _
        // Predicated region
        $region37: #{tpu_custom_call.1} parent=31 // pred_check
          %p261 = pneg %p83
        $region38: #{tpu_custom_call.1} parent=31 // pred_check_branch
          %263 = sbr.rel (%p261) target = $region40
        $region39: #{tpu_custom_call.1} parent=31 // pred_region
          %265 = dma.done [#allocation6], 256
        $region40: #{tpu_custom_call.1} parent=31 // pred_fallthru
          _
        %s266 = sand.u32 %s49, 1
        %s267 = scalar_lea.sflag [#allocation3], %s266
        %s268 = sand.u32 %s49, 1
        %s269 = smul.addr %s268, 4
        %s270 = scalar_lea.vmem [#allocation2], %s269
        %p271 = pneg %p62
        %p272 = pneg %p59
        %p273 = pneg %p83
        %p274 = pneg %p80
        %p275 = pneg %p104
        %p276 = pneg %p101
        %p277 = pneg %p132
        %p278 = pneg %p129
        %s279 = sand.u32 %s119, 1
        %s280 = scalar_lea.sflag [#allocation4], %s279
        %s281 = sand.u32 %s119, 1
        %s282 = smul.addr %s281, 16
        %s283 = scalar_lea.vmem [#allocation7], %s282
        %p284 = pneg %p160
        %p285 = pneg %p157
        %s286 = sand.u32 %s27, 1
        %s287 = scalar_lea.sflag [#allocation9], %s286
        %s288 = sand.u32 %s147, 1
        %s289 = smul.addr %s288, 16
        %s290 = scalar_lea.vmem [#allocation8], %s289
        %p291 = pneg %p188
        %p292 = pneg %p185
        %s293 = sand.u32 %s27, 1
        %s294 = scalar_lea.sflag [#allocation9], %s293
        %s295 = sand.u32 %s175, 1
        %s296 = smul.addr %s295, 16
        %s297 = scalar_lea.vmem [#allocation10], %s296
        %v299 = vld [vmem:[%s255] sm:$0xf]
        %v300 = vld [vmem:[#allocation5] sm:$0xf]
        %v301 = vld [vmem:[#allocation5 + $0x4] sm:$0xf]
        %v302 = vld [vmem:[#allocation5 + $0x8] sm:$0xf]
        %v303 = vld [vmem:[#allocation5 + $0xc] sm:$0xf]
        %v304 = vld [vmem:[%s2] sm:$0x1]
        %v306 = vperm.slane %v304, 0
        %v312 = vunpack.c.l.b16 %v300
        %v313 = vunpack.c.l.b16 %v301
        %v314 = vunpack.c.l.b16 %v302
        %v315 = vunpack.c.l.b16 %v303
        %v316 = vpack.c.b16 %v313, %v312
        %v317 = vpack.c.b16 %v315, %v314
        %vm320 = vcmask 261120
        %v322 = vsel %vm320, %v299, 0
        %324 = vmatpush.bf16.msra.mxu0 0
        %325 = vmatpush.bf16.msra.mxu0 0
        %326 = vmatpush.bf16.msra.mxu0 0
        %327 = vmatpush.bf16.msra.mxu0 0
        %328 = vmatpush.bf16.msra.mxu0 0
        %329 = vmatpush.bf16.msra.mxu0 0
        %330 = vmatpush.bf16.msra.mxu0 %v317
        %331 = vmatpush.bf16.msra.mxu0 %v316
        %332 = vmatmul.bf16.gmra.mxu0 %v322
        %v333 = vpop.f32.mrf.mxu0
        %v334 = vadd.f32 %v306, %v333
        %v335 = vpop.f32.mrf.mxu0
        %336 = vdwg.mxu0
        %v337 = vpack.c.bf16 %v334, %v334
        %vm338 = vcmask 60416
        %339 = vst.msk [vmem:[%s283] sm:$0xf] %vm338, %v337
        %341 = vrot.lane.b32.xlu0 %v337, 96
        %v342 = vpop.permute.xlu0 %341
        %344 = vst.msk [vmem:[%s290] sm:$0xf] %vm338, %v342
        %345 = vrot.lane.b32.xlu0 %v337, 64
        %v346 = vpop.permute.xlu0 %345
        %348 = vst.msk [vmem:[%s297] sm:$0xf] %vm338, %v346
        %349 = vrot.lane.b32.xlu0 %v337, 120
        %v350 = vpop.permute.xlu0 %349
        %s352 = scalar_lea.vmem %s283, 4 [#allocation7]
        %353 = vst.msk [vmem:[%s352] sm:$0xf] %vm338, %v350
        %354 = vrot.lane.b32.xlu0 %v337, 88
        %v355 = vpop.permute.xlu0 %354
        %s357 = scalar_lea.vmem %s290, 4 [#allocation8]
        %358 = vst.msk [vmem:[%s357] sm:$0xf] %vm338, %v355
        %359 = vrot.lane.b32.xlu0 %v337, 56
        %v360 = vpop.permute.xlu0 %359
        %s362 = scalar_lea.vmem %s297, 4 [#allocation10]
        %363 = vst.msk [vmem:[%s362] sm:$0xf] %vm338, %v360
        %364 = vrot.lane.b32.xlu0 %v337, 112
        %v365 = vpop.permute.xlu0 %364
        %s367 = scalar_lea.vmem %s283, 8 [#allocation7]
        %368 = vst.msk [vmem:[%s367] sm:$0xf] %vm338, %v365
        %369 = vrot.lane.b32.xlu0 %v337, 80
        %v370 = vpop.permute.xlu0 %369
        %s372 = scalar_lea.vmem %s290, 8 [#allocation8]
        %373 = vst.msk [vmem:[%s372] sm:$0xf] %vm338, %v370
        %374 = vrot.lane.b32.xlu0 %v337, 48
        %v375 = vpop.permute.xlu0 %374
        %s377 = scalar_lea.vmem %s297, 8 [#allocation10]
        %378 = vst.msk [vmem:[%s377] sm:$0xf] %vm338, %v375
        %379 = vrot.lane.b32.xlu0 %v337, 104
        %v380 = vpop.permute.xlu0 %379
        %s382 = scalar_lea.vmem %s283, 12 [#allocation7]
        %383 = vst.msk [vmem:[%s382] sm:$0xf] %vm338, %v380
        %384 = vrot.lane.b32.xlu0 %v337, 72
        %v385 = vpop.permute.xlu0 %384
        %s387 = scalar_lea.vmem %s290, 12 [#allocation8]
        %388 = vst.msk [vmem:[%s387] sm:$0xf] %vm338, %v385
        %389 = vrot.lane.b32.xlu0 %v337, 40
        %v390 = vpop.permute.xlu0 %389
        %s392 = scalar_lea.vmem %s297, 12 [#allocation10]
        %393 = vst.msk [vmem:[%s392] sm:$0xf] %vm338, %v390
        %s394 = sand.u32 %s119, 1
        %s395 = scalar_lea.sflag [#allocation4], %s394
        %s396 = sand.u32 %s119, 1
        %s397 = smul.addr %s396, 16
        %s398 = scalar_lea.vmem [#allocation7], %s397
        %s399 = sand.u32 %s27, 1
        %s400 = scalar_lea.sflag [#allocation9], %s399
        %s401 = sand.u32 %s147, 1
        %s402 = smul.addr %s401, 16
        %s403 = scalar_lea.vmem [#allocation8], %s402
        %s404 = sand.u32 %s27, 1
        %s405 = scalar_lea.sflag [#allocation9], %s404
        %s406 = sand.u32 %s175, 1
        %s407 = smul.addr %s406, 16
        %s408 = scalar_lea.vmem [#allocation10], %s407
        // Predicated region
        $region41: #{tpu_custom_call.1} parent=31 // pred_check
          %p409 = pneg %p129
        $region42: #{tpu_custom_call.1} parent=31 // pred_check_branch
          %411 = sbr.rel (%p409) target = $region44
        $region43: #{tpu_custom_call.1} parent=31 // pred_region
          %413 = vsyncadd %s395, 0
          %s414 = smul.addr %s31, 4
          %s415 = sadd.s32 %s32, %s414
          %s416 = smul.addr %s415, 4
          %s417 = scalar_lea.hbm %s3, %s416
          %s418 = sshll.u32 %s398, 4
          %s419 = int_to_ptr.vmem [resolvable:$true] %s418
          %s420 = sshll.u32 %s417, 4
          %s421 = int_to_ptr.hbm [resolvable:$true] %s420
          %426 = dma.vmem_to_hbm [thread:$0]  %s419, 256, %s421, %s395, 64, 64, 4
        $region44: #{tpu_custom_call.1} parent=31 // pred_fallthru
          _
        // Predicated region
        $region45: #{tpu_custom_call.1} parent=31 // pred_check
          %p427 = pneg %p157
        $region46: #{tpu_custom_call.1} parent=31 // pred_check_branch
          %429 = sbr.rel (%p427) target = $region48
        $region47: #{tpu_custom_call.1} parent=31 // pred_region
          %431 = vsyncadd %s400, 0
          %s432 = smul.addr %s31, 4
          %s433 = sadd.s32 %s32, %s432
          %s434 = smul.addr %s433, 4
          %s435 = scalar_lea.hbm %s4, %s434
          %s436 = sshll.u32 %s403, 4
          %s437 = int_to_ptr.vmem [resolvable:$true] %s436
          %s438 = sshll.u32 %s435, 4
          %s439 = int_to_ptr.hbm [resolvable:$true] %s438
          %444 = dma.vmem_to_hbm [thread:$0]  %s437, 256, %s439, %s400, 64, 64, 4
        $region48: #{tpu_custom_call.1} parent=31 // pred_fallthru
          _
        // Predicated region
        $region49: #{tpu_custom_call.1} parent=31 // pred_check
          %p445 = pneg %p185
        $region50: #{tpu_custom_call.1} parent=31 // pred_check_branch
          %447 = sbr.rel (%p445) target = $region52
        $region51: #{tpu_custom_call.1} parent=31 // pred_region
          %449 = vsyncadd %s405, 0
          %s450 = smul.addr %s31, 4
          %s451 = sadd.s32 %s32, %s450
          %s452 = smul.addr %s451, 4
          %s453 = scalar_lea.hbm %s5, %s452
          %s454 = sshll.u32 %s408, 4
          %s455 = int_to_ptr.vmem [resolvable:$true] %s454
          %s456 = sshll.u32 %s453, 4
          %s457 = int_to_ptr.hbm [resolvable:$true] %s456
          %462 = dma.vmem_to_hbm [thread:$0]  %s455, 256, %s457, %s405, 64, 64, 4
        $region52: #{tpu_custom_call.1} parent=31 // pred_fallthru
          _
      $region32: #{tpu_custom_call.1} parent=5 // pred_fallthru
        _
      %p463 = scmp.le.s32.totalorder 2, %s22
      // Predicated region
      $region53: #{tpu_custom_call.1} parent=5 // pred_check
        %p464 = pneg %p463
      $region54: #{tpu_custom_call.1} parent=5 // pred_check_branch
        %466 = sbr.rel (%p464) target = $region56
      $region55: #{tpu_custom_call.1} parent=5 // pred_region
        %s467 = ssub.s32 %s22, 2
        // Predicated region
        $region57: #{tpu_custom_call.1} parent=55 // pred_check
          %p468 = pneg %p135
        $region58: #{tpu_custom_call.1} parent=55 // pred_check_branch
          %470 = sbr.rel (%p468) target = $region60
        $region59: #{tpu_custom_call.1} parent=55 // pred_region
          %s471 = sand.u32 %s120, 1
          %s472 = scalar_lea.sflag [#allocation4], %s471
          %s473 = sand.u32 %s120, 1
          %s474 = smul.addr %s473, 16
          %s475 = scalar_lea.vmem [#allocation7], %s474
          %477 = dma.done %s472, 256
        $region60: #{tpu_custom_call.1} parent=55 // pred_fallthru
          _
        // Predicated region
        $region61: #{tpu_custom_call.1} parent=55 // pred_check
          %p478 = pneg %p163
        $region62: #{tpu_custom_call.1} parent=55 // pred_check_branch
          %480 = sbr.rel (%p478) target = $region64
        $region63: #{tpu_custom_call.1} parent=55 // pred_region
          %s481 = sand.u32 %s28, 1
          %s482 = scalar_lea.sflag [#allocation9], %s481
          %s483 = sand.u32 %s148, 1
          %s484 = smul.addr %s483, 16
          %s485 = scalar_lea.vmem [#allocation8], %s484
          %487 = dma.done %s482, 256
        $region64: #{tpu_custom_call.1} parent=55 // pred_fallthru
          _
        // Predicated region
        $region65: #{tpu_custom_call.1} parent=55 // pred_check
          %p488 = pneg %p191
        $region66: #{tpu_custom_call.1} parent=55 // pred_check_branch
          %490 = sbr.rel (%p488) target = $region68
        $region67: #{tpu_custom_call.1} parent=55 // pred_region
          %s491 = sand.u32 %s28, 1
          %s492 = scalar_lea.sflag [#allocation9], %s491
          %s493 = sand.u32 %s176, 1
          %s494 = smul.addr %s493, 16
          %s495 = scalar_lea.vmem [#allocation10], %s494
          %497 = dma.done %s492, 256
        $region68: #{tpu_custom_call.1} parent=55 // pred_fallthru
          _
      $region56: #{tpu_custom_call.1} parent=5 // pred_fallthru
        _
    $region6: #{tpu_custom_call.1} parent=1 // loop_footer
      %s26 = sadd.s32 1, %s22
    $region7: #{tpu_custom_call.1} parent=1 // loop_footer_branch
      %21 = sbr.rel target = $region3
    $region8: #{tpu_custom_call.1} parent=1 // loop_exit
      _
    %498 = vsyncpa [#allocation3], 1
    %s499 = scalar_lea.sflag [#allocation3], 1
    %500 = vsyncpa %s499, 1
    %501 = vsyncpa [#allocation6], 1
    %502 = vsyncpa [#allocation4], 1
    %s503 = scalar_lea.sflag [#allocation4], 1
    %504 = vsyncpa %s503, 1
    %505 = vsyncpa [#allocation9], 1
    %s506 = scalar_lea.sflag [#allocation9], 1
    %507 = vsyncpa %s506, 1

</llo_original>
